<compile_context>
chip_gen: v5e
topology: v5e:2x2
jax: 0.10.0
libtpu: 0.0.40
codegen_flags: <defaults>
</compile_context>

<pallas_src>
import functools

import jax
import jax.numpy as jnp
from jax.experimental import pallas as pl
from jax.experimental.pallas import tpu as pltpu


def _lstm_kernel(ids_ref, table_ref, whh_ref, wout_ref, bout_ref, out_ref, *,
                 seq_len, batch, hidden):
    """Fused embedding gather + LSTM recurrence + final linear.

    ids_ref   : (B, T)       int32  SMEM (scalar prefetch) token ids
    table_ref : (vocab, 4H)  f32    pre-projected gate table
                                    (embed @ W_ih^T + b_ih + b_hh),
                                    PyTorch gate column order (i, f, g, o)
    whh_ref   : (H, 4H)      bf16   hidden->gates weight (transposed)
    wout_ref  : (H, O_pad)   f32    final linear weight (transposed, zero-padded)
    bout_ref  : (1, O_pad)   f32    final linear bias (zero-padded)
    out_ref   : (B, O_pad)   f32    lane-dense padded output
    """
    T, B, H = seq_len, batch, hidden

    whh = whh_ref[...]                                   # (H, 4H) bf16, resident

    # In-kernel embedding gather against the pre-projected gate table.  Each
    # gathered row is already `x_t @ W_ih^T + b_ih + b_hh` (lane-dense,
    # 4H = 128 lanes).  These loads are independent of h/c, so the fully
    # unrolled schedule can overlap them with the serial recurrence.
    gx = []
    for t in range(T):
        rows = [table_ref[pl.ds(ids_ref[b, t], 1), :] for b in range(B)]
        gx.append(jnp.concatenate(rows, axis=0))         # (B, 4H) f32

    h_bf = jnp.zeros((B, H), jnp.bfloat16)               # MXU operand dtype
    h_f32 = jnp.zeros((B, H), jnp.float32)
    c = jnp.zeros((B, H), jnp.float32)

    # Fully-unrolled time loop (T static & small): h/c are loop-carried vreg
    # values; each step issues one small bf16 MXU matmul with f32 accumulation.
    for t in range(T):
        gates = gx[t] + jnp.dot(h_bf, whh,
                                preferred_element_type=jnp.float32)  # (B, 4H)
        # Full-width activations: one sigmoid push + one tanh push over the
        # whole (B, 4H) vreg, then static lane slices (PyTorch order i,f,g,o).
        sig = jax.nn.sigmoid(gates)
        tnh = jnp.tanh(gates)
        i_g = sig[:, 0 * H:1 * H]
        f_g = sig[:, 1 * H:2 * H]
        g_g = tnh[:, 2 * H:3 * H]
        o_g = sig[:, 3 * H:4 * H]
        c = f_g * c + i_g * g_g
        h_f32 = o_g * jnp.tanh(c)
        h_bf = h_f32.astype(jnp.bfloat16)                # single convert per step

    # hidden = hidden[-1]; output = linear(hidden).  Output kept lane-dense
    # (O padded to 128) so the store and output DMA are unmasked.
    out_ref[...] = (jnp.dot(h_f32, wout_ref[...],
                            preferred_element_type=jnp.float32)
                    + bout_ref[...])


@functools.partial(jax.jit, static_argnames=("output_size",))
def rnn_forward(token_ids, embed_table, w_ih, w_hh, b_ih, b_hh,
                w_lin, b_lin, *, output_size):
    """token_ids: (B, T) int32.  Returns (B, output_size) float32."""
    B, T = token_ids.shape
    H = w_hh.shape[1]
    vocab = embed_table.shape[0]
    o_pad = max(128, pl.cdiv(output_size, 128) * 128)

    # ---- Parameter-only transforms (done once per weight update in practice;
    # ---- the per-token work is the single pallas_call below). --------------
    # Pre-project the embedding table into gate space and fold in both biases.
    table_gates = (jnp.dot(embed_table, w_ih.T,
                           preferred_element_type=jnp.float32)
                   + (b_ih + b_hh)[None, :])              # (vocab, 4H) f32
    whh_t = w_hh.T.astype(jnp.bfloat16)                   # (H, 4H) bf16
    # Lane-dense output path: zero-pad the linear layer to a 128-lane multiple.
    wout = jnp.zeros((H, o_pad), jnp.float32).at[:, :output_size].set(w_lin.T)
    bout = jnp.zeros((1, o_pad), jnp.float32).at[0, :output_size].set(b_lin)

    kernel = functools.partial(_lstm_kernel, seq_len=T, batch=B, hidden=H)

    grid_spec = pltpu.PrefetchScalarGridSpec(
        num_scalar_prefetch=1,                            # token_ids -> SMEM
        grid=(1,),
        in_specs=[
            pl.BlockSpec((vocab, 4 * H), lambda i, ids: (0, 0)),
            pl.BlockSpec((H, 4 * H), lambda i, ids: (0, 0)),
            pl.BlockSpec((H, o_pad), lambda i, ids: (0, 0)),
            pl.BlockSpec((1, o_pad), lambda i, ids: (0, 0)),
        ],
        out_specs=pl.BlockSpec((B, o_pad), lambda i, ids: (0, 0)),
    )

    out_pad = pl.pallas_call(
        kernel,
        grid_spec=grid_spec,
        out_shape=jax.ShapeDtypeStruct((B, o_pad), jnp.float32),
        compiler_params=pltpu.CompilerParams(
            dimension_semantics=("arbitrary",)),
    )(token_ids, table_gates, whh_t, wout, bout)

    return out_pad[:, :output_size]


def rnn_forward_ref(token_ids, embed_table, w_ih, w_hh, b_ih, b_hh,
                    w_lin, b_lin):
    """Pure-JAX f32 reference with PyTorch gate order (i, f, g, o)."""
    B, T = token_ids.shape
    H = w_hh.shape[1]
    emb = jnp.take(embed_table, token_ids, axis=0)        # (B, T, E)
    h = jnp.zeros((B, H), jnp.float32)
    c = jnp.zeros((B, H), jnp.float32)
    for t in range(T):
        gates = emb[:, t] @ w_ih.T + h @ w_hh.T + b_ih + b_hh
        i = jax.nn.sigmoid(gates[:, 0 * H:1 * H])
        f = jax.nn.sigmoid(gates[:, 1 * H:2 * H])
        g = jnp.tanh(gates[:, 2 * H:3 * H])
        o = jax.nn.sigmoid(gates[:, 3 * H:4 * H])
        c = f * c + i * g
        h = o * jnp.tanh(c)
    return h @ w_lin.T + b_lin


def init_params(key, vocab_size, embed_size, hidden_size, output_size):
    """Synthetic parameters matching nn.Embedding / nn.LSTM / nn.Linear shapes."""
    ks = jax.random.split(key, 7)
    embed_table = jax.random.normal(ks[0], (vocab_size, embed_size), jnp.float32)
    embed_table = embed_table.at[1].set(0.0)              # padding_idx=1 -> zero row

    bound = 1.0 / jnp.sqrt(hidden_size)
    u = lambda k, shape: jax.random.uniform(k, shape, jnp.float32, -bound, bound)
    w_ih = u(ks[1], (4 * hidden_size, embed_size))        # PyTorch weight_ih_l0
    w_hh = u(ks[2], (4 * hidden_size, hidden_size))       # PyTorch weight_hh_l0
    b_ih = u(ks[3], (4 * hidden_size,))
    b_hh = u(ks[4], (4 * hidden_size,))

    lin_bound = 1.0 / jnp.sqrt(hidden_size)
    w_lin = jax.random.uniform(ks[5], (output_size, hidden_size), jnp.float32,
                               -lin_bound, lin_bound)
    b_lin = jax.random.uniform(ks[6], (output_size,), jnp.float32,
                               -lin_bound, lin_bound)
    return embed_table, w_ih, w_hh, b_ih, b_hh, w_lin, b_lin


if __name__ == "__main__":
    # Small shapes consistent with the module: vocab=20, embed=16, hidden=32, out=8
    vocab_size, embed_size, hidden_size, output_size = 20, 16, 32, 8
    batch, seq = 2, 8

    key = jax.random.PRNGKey(0)
    k_params, k_ids = jax.random.split(key)
    params = init_params(k_params, vocab_size, embed_size, hidden_size, output_size)
    token_ids = jax.random.randint(k_ids, (batch, seq), 0, vocab_size, jnp.int32)

    out = rnn_forward(token_ids, *params, output_size=output_size)
    jax.block_until_ready(out)
    assert out.shape == (batch, output_size)
    assert jnp.all(jnp.isfinite(out))

    # Numerical check against the f32 pure-JAX reference.  Only the recurrent
    # h @ W_hh matmul runs in bf16, so the tolerance can be fairly tight.
    ref = rnn_forward_ref(token_ids, *params)
    assert jnp.allclose(out, ref, atol=2e-2, rtol=2e-2)

    print("KERNEL_OK")
</pallas_src>

<mosaic_0001>
module attributes {stable_mosaic.version = 11 : i64} {
  func.func @_lstm_kernel(%arg0: i32, %arg1: memref<2x8xi32, #tpu.memory_space<smem>>, %arg2: memref<20x128xf32, #tpu.memory_space<vmem>>, %arg3: memref<32x128xbf16, #tpu.memory_space<vmem>>, %arg4: memref<32x128xf32, #tpu.memory_space<vmem>>, %arg5: memref<1x128xf32, #tpu.memory_space<vmem>>, %arg6: memref<2x128xf32, #tpu.memory_space<vmem>>) attributes {dimension_semantics = [#tpu.dimension_semantics<arbitrary>], iteration_bounds = array<i64: 1>, scalar_prefetch = 1 : i64, scratch_operands = 0 : i64, tpu.core_type = #tpu.core_type<tc>, window_params = [{pipeline_mode = #tpu.pipeline_mode<synchronous>, transform_indices = @transform_0, window_bounds = array<i64: 20, 128>}, {pipeline_mode = #tpu.pipeline_mode<synchronous>, transform_indices = @transform_1, window_bounds = array<i64: 32, 128>}, {pipeline_mode = #tpu.pipeline_mode<synchronous>, transform_indices = @transform_2, window_bounds = array<i64: 32, 128>}, {pipeline_mode = #tpu.pipeline_mode<synchronous>, transform_indices = @transform_3, window_bounds = array<i64: 1, 128>}, {pipeline_mode = #tpu.pipeline_mode<synchronous>, transform_indices = @transform_4, window_bounds = array<i64: 2, 128>}]} {
    %c0 = arith.constant 0 : index
    %c0_0 = arith.constant 0 : index
    %0 = vector.load %arg3[%c0, %c0_0] : memref<32x128xbf16, #tpu.memory_space<vmem>>, vector<32x128xbf16>
    %c0_1 = arith.constant 0 : index
    %c0_2 = arith.constant 0 : index
    %1 = memref.load %arg1[%c0_1, %c0_2] : memref<2x8xi32, #tpu.memory_space<smem>>
    %2 = arith.index_cast %1 : i32 to index
    %c0_3 = arith.constant 0 : index
    %3 = vector.load %arg2[%2, %c0_3] : memref<20x128xf32, #tpu.memory_space<vmem>>, vector<1x128xf32>
    %c1 = arith.constant 1 : index
    %c0_4 = arith.constant 0 : index
    %4 = memref.load %arg1[%c1, %c0_4] : memref<2x8xi32, #tpu.memory_space<smem>>
    %5 = arith.index_cast %4 : i32 to index
    %c0_5 = arith.constant 0 : index
    %6 = vector.load %arg2[%5, %c0_5] : memref<20x128xf32, #tpu.memory_space<vmem>>, vector<1x128xf32>
    %7 = tpu.concatenate %3, %6 in 0 : vector<1x128xf32>, vector<1x128xf32> -> vector<2x128xf32>
    %c0_6 = arith.constant 0 : index
    %c1_7 = arith.constant 1 : index
    %8 = memref.load %arg1[%c0_6, %c1_7] : memref<2x8xi32, #tpu.memory_space<smem>>
    %9 = arith.index_cast %8 : i32 to index
    %c0_8 = arith.constant 0 : index
    %10 = vector.load %arg2[%9, %c0_8] : memref<20x128xf32, #tpu.memory_space<vmem>>, vector<1x128xf32>
    %c1_9 = arith.constant 1 : index
    %c1_10 = arith.constant 1 : index
    %11 = memref.load %arg1[%c1_9, %c1_10] : memref<2x8xi32, #tpu.memory_space<smem>>
    %12 = arith.index_cast %11 : i32 to index
    %c0_11 = arith.constant 0 : index
    %13 = vector.load %arg2[%12, %c0_11] : memref<20x128xf32, #tpu.memory_space<vmem>>, vector<1x128xf32>
    %14 = tpu.concatenate %10, %13 in 0 : vector<1x128xf32>, vector<1x128xf32> -> vector<2x128xf32>
    %c0_12 = arith.constant 0 : index
    %c2 = arith.constant 2 : index
    %15 = memref.load %arg1[%c0_12, %c2] : memref<2x8xi32, #tpu.memory_space<smem>>
    %16 = arith.index_cast %15 : i32 to index
    %c0_13 = arith.constant 0 : index
    %17 = vector.load %arg2[%16, %c0_13] : memref<20x128xf32, #tpu.memory_space<vmem>>, vector<1x128xf32>
    %c1_14 = arith.constant 1 : index
    %c2_15 = arith.constant 2 : index
    %18 = memref.load %arg1[%c1_14, %c2_15] : memref<2x8xi32, #tpu.memory_space<smem>>
    %19 = arith.index_cast %18 : i32 to index
    %c0_16 = arith.constant 0 : index
    %20 = vector.load %arg2[%19, %c0_16] : memref<20x128xf32, #tpu.memory_space<vmem>>, vector<1x128xf32>
    %21 = tpu.concatenate %17, %20 in 0 : vector<1x128xf32>, vector<1x128xf32> -> vector<2x128xf32>
    %c0_17 = arith.constant 0 : index
    %c3 = arith.constant 3 : index
    %22 = memref.load %arg1[%c0_17, %c3] : memref<2x8xi32, #tpu.memory_space<smem>>
    %23 = arith.index_cast %22 : i32 to index
    %c0_18 = arith.constant 0 : index
    %24 = vector.load %arg2[%23, %c0_18] : memref<20x128xf32, #tpu.memory_space<vmem>>, vector<1x128xf32>
    %c1_19 = arith.constant 1 : index
    %c3_20 = arith.constant 3 : index
    %25 = memref.load %arg1[%c1_19, %c3_20] : memref<2x8xi32, #tpu.memory_space<smem>>
    %26 = arith.index_cast %25 : i32 to index
    %c0_21 = arith.constant 0 : index
    %27 = vector.load %arg2[%26, %c0_21] : memref<20x128xf32, #tpu.memory_space<vmem>>, vector<1x128xf32>
    %28 = tpu.concatenate %24, %27 in 0 : vector<1x128xf32>, vector<1x128xf32> -> vector<2x128xf32>
    %c0_22 = arith.constant 0 : index
    %c4 = arith.constant 4 : index
    %29 = memref.load %arg1[%c0_22, %c4] : memref<2x8xi32, #tpu.memory_space<smem>>
    %30 = arith.index_cast %29 : i32 to index
    %c0_23 = arith.constant 0 : index
    %31 = vector.load %arg2[%30, %c0_23] : memref<20x128xf32, #tpu.memory_space<vmem>>, vector<1x128xf32>
    %c1_24 = arith.constant 1 : index
    %c4_25 = arith.constant 4 : index
    %32 = memref.load %arg1[%c1_24, %c4_25] : memref<2x8xi32, #tpu.memory_space<smem>>
    %33 = arith.index_cast %32 : i32 to index
    %c0_26 = arith.constant 0 : index
    %34 = vector.load %arg2[%33, %c0_26] : memref<20x128xf32, #tpu.memory_space<vmem>>, vector<1x128xf32>
    %35 = tpu.concatenate %31, %34 in 0 : vector<1x128xf32>, vector<1x128xf32> -> vector<2x128xf32>
    %c0_27 = arith.constant 0 : index
    %c5 = arith.constant 5 : index
    %36 = memref.load %arg1[%c0_27, %c5] : memref<2x8xi32, #tpu.memory_space<smem>>
    %37 = arith.index_cast %36 : i32 to index
    %c0_28 = arith.constant 0 : index
    %38 = vector.load %arg2[%37, %c0_28] : memref<20x128xf32, #tpu.memory_space<vmem>>, vector<1x128xf32>
    %c1_29 = arith.constant 1 : index
    %c5_30 = arith.constant 5 : index
    %39 = memref.load %arg1[%c1_29, %c5_30] : memref<2x8xi32, #tpu.memory_space<smem>>
    %40 = arith.index_cast %39 : i32 to index
    %c0_31 = arith.constant 0 : index
    %41 = vector.load %arg2[%40, %c0_31] : memref<20x128xf32, #tpu.memory_space<vmem>>, vector<1x128xf32>
    %42 = tpu.concatenate %38, %41 in 0 : vector<1x128xf32>, vector<1x128xf32> -> vector<2x128xf32>
    %c0_32 = arith.constant 0 : index
    %c6 = arith.constant 6 : index
    %43 = memref.load %arg1[%c0_32, %c6] : memref<2x8xi32, #tpu.memory_space<smem>>
    %44 = arith.index_cast %43 : i32 to index
    %c0_33 = arith.constant 0 : index
    %45 = vector.load %arg2[%44, %c0_33] : memref<20x128xf32, #tpu.memory_space<vmem>>, vector<1x128xf32>
    %c1_34 = arith.constant 1 : index
    %c6_35 = arith.constant 6 : index
    %46 = memref.load %arg1[%c1_34, %c6_35] : memref<2x8xi32, #tpu.memory_space<smem>>
    %47 = arith.index_cast %46 : i32 to index
    %c0_36 = arith.constant 0 : index
    %48 = vector.load %arg2[%47, %c0_36] : memref<20x128xf32, #tpu.memory_space<vmem>>, vector<1x128xf32>
    %49 = tpu.concatenate %45, %48 in 0 : vector<1x128xf32>, vector<1x128xf32> -> vector<2x128xf32>
    %c0_37 = arith.constant 0 : index
    %c7 = arith.constant 7 : index
    %50 = memref.load %arg1[%c0_37, %c7] : memref<2x8xi32, #tpu.memory_space<smem>>
    %51 = arith.index_cast %50 : i32 to index
    %c0_38 = arith.constant 0 : index
    %52 = vector.load %arg2[%51, %c0_38] : memref<20x128xf32, #tpu.memory_space<vmem>>, vector<1x128xf32>
    %c1_39 = arith.constant 1 : index
    %c7_40 = arith.constant 7 : index
    %53 = memref.load %arg1[%c1_39, %c7_40] : memref<2x8xi32, #tpu.memory_space<smem>>
    %54 = arith.index_cast %53 : i32 to index
    %c0_41 = arith.constant 0 : index
    %55 = vector.load %arg2[%54, %c0_41] : memref<20x128xf32, #tpu.memory_space<vmem>>, vector<1x128xf32>
    %56 = tpu.concatenate %52, %55 in 0 : vector<1x128xf32>, vector<1x128xf32> -> vector<2x128xf32>
    %cst = arith.constant 0.000000e+00 : bf16
    %57 = vector.broadcast %cst : bf16 to vector<2x32xbf16>
    %cst_42 = arith.constant 0.000000e+00 : f32
    %58 = vector.broadcast %cst_42 : f32 to vector<2x32xf32>
    %cst_43 = arith.constant dense<0.000000e+00> : vector<2x128xf32>
    %59 = tpu.matmul %57, %0, %cst_43 {dimension_numbers = #tpu.dot_dimension_numbers<[1], [0], [0], [1], [0, 0, 1, 1], [], []>} : vector<2x32xbf16>, vector<32x128xbf16>, vector<2x128xf32> -> vector<2x128xf32>
    %60 = arith.addf %7, %59 : vector<2x128xf32>
    %61 = arith.negf %60 : vector<2x128xf32>
    %62 = math.exp %61 : vector<2x128xf32>
    %cst_44 = arith.constant 1.000000e+00 : f32
    %63 = vector.broadcast %cst_44 : f32 to vector<2x128xf32>
    %64 = arith.addf %63, %62 : vector<2x128xf32>
    %65 = arith.divf %63, %64 : vector<2x128xf32>
    %66 = math.tanh %60 : vector<2x128xf32>
    %67 = vector.extract_strided_slice %65 {offsets = [0, 0], sizes = [2, 32], strides = [1, 1]} : vector<2x128xf32> to vector<2x32xf32>
    %68 = vector.extract_strided_slice %65 {offsets = [0, 32], sizes = [2, 32], strides = [1, 1]} : vector<2x128xf32> to vector<2x32xf32>
    %69 = vector.extract_strided_slice %66 {offsets = [0, 64], sizes = [2, 32], strides = [1, 1]} : vector<2x128xf32> to vector<2x32xf32>
    %70 = vector.extract_strided_slice %65 {offsets = [0, 96], sizes = [2, 32], strides = [1, 1]} : vector<2x128xf32> to vector<2x32xf32>
    %71 = arith.mulf %68, %58 : vector<2x32xf32>
    %72 = arith.mulf %67, %69 : vector<2x32xf32>
    %73 = arith.addf %71, %72 : vector<2x32xf32>
    %74 = math.tanh %73 : vector<2x32xf32>
    %75 = arith.mulf %70, %74 : vector<2x32xf32>
    %76 = arith.truncf %75 : vector<2x32xf32> to vector<2x32xbf16>
    %cst_45 = arith.constant dense<0.000000e+00> : vector<2x128xf32>
    %77 = tpu.matmul %76, %0, %cst_45 {dimension_numbers = #tpu.dot_dimension_numbers<[1], [0], [0], [1], [0, 0, 1, 1], [], []>} : vector<2x32xbf16>, vector<32x128xbf16>, vector<2x128xf32> -> vector<2x128xf32>
    %78 = arith.addf %14, %77 : vector<2x128xf32>
    %79 = arith.negf %78 : vector<2x128xf32>
    %80 = math.exp %79 : vector<2x128xf32>
    %cst_46 = arith.constant 1.000000e+00 : f32
    %81 = vector.broadcast %cst_46 : f32 to vector<2x128xf32>
    %82 = arith.addf %81, %80 : vector<2x128xf32>
    %83 = arith.divf %81, %82 : vector<2x128xf32>
    %84 = math.tanh %78 : vector<2x128xf32>
    %85 = vector.extract_strided_slice %83 {offsets = [0, 0], sizes = [2, 32], strides = [1, 1]} : vector<2x128xf32> to vector<2x32xf32>
    %86 = vector.extract_strided_slice %83 {offsets = [0, 32], sizes = [2, 32], strides = [1, 1]} : vector<2x128xf32> to vector<2x32xf32>
    %87 = vector.extract_strided_slice %84 {offsets = [0, 64], sizes = [2, 32], strides = [1, 1]} : vector<2x128xf32> to vector<2x32xf32>
    %88 = vector.extract_strided_slice %83 {offsets = [0, 96], sizes = [2, 32], strides = [1, 1]} : vector<2x128xf32> to vector<2x32xf32>
    %89 = arith.mulf %86, %73 : vector<2x32xf32>
    %90 = arith.mulf %85, %87 : vector<2x32xf32>
    %91 = arith.addf %89, %90 : vector<2x32xf32>
    %92 = math.tanh %91 : vector<2x32xf32>
    %93 = arith.mulf %88, %92 : vector<2x32xf32>
    %94 = arith.truncf %93 : vector<2x32xf32> to vector<2x32xbf16>
    %cst_47 = arith.constant dense<0.000000e+00> : vector<2x128xf32>
    %95 = tpu.matmul %94, %0, %cst_47 {dimension_numbers = #tpu.dot_dimension_numbers<[1], [0], [0], [1], [0, 0, 1, 1], [], []>} : vector<2x32xbf16>, vector<32x128xbf16>, vector<2x128xf32> -> vector<2x128xf32>
    %96 = arith.addf %21, %95 : vector<2x128xf32>
    %97 = arith.negf %96 : vector<2x128xf32>
    %98 = math.exp %97 : vector<2x128xf32>
    %cst_48 = arith.constant 1.000000e+00 : f32
    %99 = vector.broadcast %cst_48 : f32 to vector<2x128xf32>
    %100 = arith.addf %99, %98 : vector<2x128xf32>
    %101 = arith.divf %99, %100 : vector<2x128xf32>
    %102 = math.tanh %96 : vector<2x128xf32>
    %103 = vector.extract_strided_slice %101 {offsets = [0, 0], sizes = [2, 32], strides = [1, 1]} : vector<2x128xf32> to vector<2x32xf32>
    %104 = vector.extract_strided_slice %101 {offsets = [0, 32], sizes = [2, 32], strides = [1, 1]} : vector<2x128xf32> to vector<2x32xf32>
    %105 = vector.extract_strided_slice %102 {offsets = [0, 64], sizes = [2, 32], strides = [1, 1]} : vector<2x128xf32> to vector<2x32xf32>
    %106 = vector.extract_strided_slice %101 {offsets = [0, 96], sizes = [2, 32], strides = [1, 1]} : vector<2x128xf32> to vector<2x32xf32>
    %107 = arith.mulf %104, %91 : vector<2x32xf32>
    %108 = arith.mulf %103, %105 : vector<2x32xf32>
    %109 = arith.addf %107, %108 : vector<2x32xf32>
    %110 = math.tanh %109 : vector<2x32xf32>
    %111 = arith.mulf %106, %110 : vector<2x32xf32>
    %112 = arith.truncf %111 : vector<2x32xf32> to vector<2x32xbf16>
    %cst_49 = arith.constant dense<0.000000e+00> : vector<2x128xf32>
    %113 = tpu.matmul %112, %0, %cst_49 {dimension_numbers = #tpu.dot_dimension_numbers<[1], [0], [0], [1], [0, 0, 1, 1], [], []>} : vector<2x32xbf16>, vector<32x128xbf16>, vector<2x128xf32> -> vector<2x128xf32>
    %114 = arith.addf %28, %113 : vector<2x128xf32>
    %115 = arith.negf %114 : vector<2x128xf32>
    %116 = math.exp %115 : vector<2x128xf32>
    %cst_50 = arith.constant 1.000000e+00 : f32
    %117 = vector.broadcast %cst_50 : f32 to vector<2x128xf32>
    %118 = arith.addf %117, %116 : vector<2x128xf32>
    %119 = arith.divf %117, %118 : vector<2x128xf32>
    %120 = math.tanh %114 : vector<2x128xf32>
    %121 = vector.extract_strided_slice %119 {offsets = [0, 0], sizes = [2, 32], strides = [1, 1]} : vector<2x128xf32> to vector<2x32xf32>
    %122 = vector.extract_strided_slice %119 {offsets = [0, 32], sizes = [2, 32], strides = [1, 1]} : vector<2x128xf32> to vector<2x32xf32>
    %123 = vector.extract_strided_slice %120 {offsets = [0, 64], sizes = [2, 32], strides = [1, 1]} : vector<2x128xf32> to vector<2x32xf32>
    %124 = vector.extract_strided_slice %119 {offsets = [0, 96], sizes = [2, 32], strides = [1, 1]} : vector<2x128xf32> to vector<2x32xf32>
    %125 = arith.mulf %122, %109 : vector<2x32xf32>
    %126 = arith.mulf %121, %123 : vector<2x32xf32>
    %127 = arith.addf %125, %126 : vector<2x32xf32>
    %128 = math.tanh %127 : vector<2x32xf32>
    %129 = arith.mulf %124, %128 : vector<2x32xf32>
    %130 = arith.truncf %129 : vector<2x32xf32> to vector<2x32xbf16>
    %cst_51 = arith.constant dense<0.000000e+00> : vector<2x128xf32>
    %131 = tpu.matmul %130, %0, %cst_51 {dimension_numbers = #tpu.dot_dimension_numbers<[1], [0], [0], [1], [0, 0, 1, 1], [], []>} : vector<2x32xbf16>, vector<32x128xbf16>, vector<2x128xf32> -> vector<2x128xf32>
    %132 = arith.addf %35, %131 : vector<2x128xf32>
    %133 = arith.negf %132 : vector<2x128xf32>
    %134 = math.exp %133 : vector<2x128xf32>
    %cst_52 = arith.constant 1.000000e+00 : f32
    %135 = vector.broadcast %cst_52 : f32 to vector<2x128xf32>
    %136 = arith.addf %135, %134 : vector<2x128xf32>
    %137 = arith.divf %135, %136 : vector<2x128xf32>
    %138 = math.tanh %132 : vector<2x128xf32>
    %139 = vector.extract_strided_slice %137 {offsets = [0, 0], sizes = [2, 32], strides = [1, 1]} : vector<2x128xf32> to vector<2x32xf32>
    %140 = vector.extract_strided_slice %137 {offsets = [0, 32], sizes = [2, 32], strides = [1, 1]} : vector<2x128xf32> to vector<2x32xf32>
    %141 = vector.extract_strided_slice %138 {offsets = [0, 64], sizes = [2, 32], strides = [1, 1]} : vector<2x128xf32> to vector<2x32xf32>
    %142 = vector.extract_strided_slice %137 {offsets = [0, 96], sizes = [2, 32], strides = [1, 1]} : vector<2x128xf32> to vector<2x32xf32>
    %143 = arith.mulf %140, %127 : vector<2x32xf32>
    %144 = arith.mulf %139, %141 : vector<2x32xf32>
    %145 = arith.addf %143, %144 : vector<2x32xf32>
    %146 = math.tanh %145 : vector<2x32xf32>
    %147 = arith.mulf %142, %146 : vector<2x32xf32>
    %148 = arith.truncf %147 : vector<2x32xf32> to vector<2x32xbf16>
    %cst_53 = arith.constant dense<0.000000e+00> : vector<2x128xf32>
    %149 = tpu.matmul %148, %0, %cst_53 {dimension_numbers = #tpu.dot_dimension_numbers<[1], [0], [0], [1], [0, 0, 1, 1], [], []>} : vector<2x32xbf16>, vector<32x128xbf16>, vector<2x128xf32> -> vector<2x128xf32>
    %150 = arith.addf %42, %149 : vector<2x128xf32>
    %151 = arith.negf %150 : vector<2x128xf32>
    %152 = math.exp %151 : vector<2x128xf32>
    %cst_54 = arith.constant 1.000000e+00 : f32
    %153 = vector.broadcast %cst_54 : f32 to vector<2x128xf32>
    %154 = arith.addf %153, %152 : vector<2x128xf32>
    %155 = arith.divf %153, %154 : vector<2x128xf32>
    %156 = math.tanh %150 : vector<2x128xf32>
    %157 = vector.extract_strided_slice %155 {offsets = [0, 0], sizes = [2, 32], strides = [1, 1]} : vector<2x128xf32> to vector<2x32xf32>
    %158 = vector.extract_strided_slice %155 {offsets = [0, 32], sizes = [2, 32], strides = [1, 1]} : vector<2x128xf32> to vector<2x32xf32>
    %159 = vector.extract_strided_slice %156 {offsets = [0, 64], sizes = [2, 32], strides = [1, 1]} : vector<2x128xf32> to vector<2x32xf32>
    %160 = vector.extract_strided_slice %155 {offsets = [0, 96], sizes = [2, 32], strides = [1, 1]} : vector<2x128xf32> to vector<2x32xf32>
    %161 = arith.mulf %158, %145 : vector<2x32xf32>
    %162 = arith.mulf %157, %159 : vector<2x32xf32>
    %163 = arith.addf %161, %162 : vector<2x32xf32>
    %164 = math.tanh %163 : vector<2x32xf32>
    %165 = arith.mulf %160, %164 : vector<2x32xf32>
    %166 = arith.truncf %165 : vector<2x32xf32> to vector<2x32xbf16>
    %cst_55 = arith.constant dense<0.000000e+00> : vector<2x128xf32>
    %167 = tpu.matmul %166, %0, %cst_55 {dimension_numbers = #tpu.dot_dimension_numbers<[1], [0], [0], [1], [0, 0, 1, 1], [], []>} : vector<2x32xbf16>, vector<32x128xbf16>, vector<2x128xf32> -> vector<2x128xf32>
    %168 = arith.addf %49, %167 : vector<2x128xf32>
    %169 = arith.negf %168 : vector<2x128xf32>
    %170 = math.exp %169 : vector<2x128xf32>
    %cst_56 = arith.constant 1.000000e+00 : f32
    %171 = vector.broadcast %cst_56 : f32 to vector<2x128xf32>
    %172 = arith.addf %171, %170 : vector<2x128xf32>
    %173 = arith.divf %171, %172 : vector<2x128xf32>
    %174 = math.tanh %168 : vector<2x128xf32>
    %175 = vector.extract_strided_slice %173 {offsets = [0, 0], sizes = [2, 32], strides = [1, 1]} : vector<2x128xf32> to vector<2x32xf32>
    %176 = vector.extract_strided_slice %173 {offsets = [0, 32], sizes = [2, 32], strides = [1, 1]} : vector<2x128xf32> to vector<2x32xf32>
    %177 = vector.extract_strided_slice %174 {offsets = [0, 64], sizes = [2, 32], strides = [1, 1]} : vector<2x128xf32> to vector<2x32xf32>
    %178 = vector.extract_strided_slice %173 {offsets = [0, 96], sizes = [2, 32], strides = [1, 1]} : vector<2x128xf32> to vector<2x32xf32>
    %179 = arith.mulf %176, %163 : vector<2x32xf32>
    %180 = arith.mulf %175, %177 : vector<2x32xf32>
    %181 = arith.addf %179, %180 : vector<2x32xf32>
    %182 = math.tanh %181 : vector<2x32xf32>
    %183 = arith.mulf %178, %182 : vector<2x32xf32>
    %184 = arith.truncf %183 : vector<2x32xf32> to vector<2x32xbf16>
    %cst_57 = arith.constant dense<0.000000e+00> : vector<2x128xf32>
    %185 = tpu.matmul %184, %0, %cst_57 {dimension_numbers = #tpu.dot_dimension_numbers<[1], [0], [0], [1], [0, 0, 1, 1], [], []>} : vector<2x32xbf16>, vector<32x128xbf16>, vector<2x128xf32> -> vector<2x128xf32>
    %186 = arith.addf %56, %185 : vector<2x128xf32>
    %187 = arith.negf %186 : vector<2x128xf32>
    %188 = math.exp %187 : vector<2x128xf32>
    %cst_58 = arith.constant 1.000000e+00 : f32
    %189 = vector.broadcast %cst_58 : f32 to vector<2x128xf32>
    %190 = arith.addf %189, %188 : vector<2x128xf32>
    %191 = arith.divf %189, %190 : vector<2x128xf32>
    %192 = math.tanh %186 : vector<2x128xf32>
    %193 = vector.extract_strided_slice %191 {offsets = [0, 0], sizes = [2, 32], strides = [1, 1]} : vector<2x128xf32> to vector<2x32xf32>
    %194 = vector.extract_strided_slice %191 {offsets = [0, 32], sizes = [2, 32], strides = [1, 1]} : vector<2x128xf32> to vector<2x32xf32>
    %195 = vector.extract_strided_slice %192 {offsets = [0, 64], sizes = [2, 32], strides = [1, 1]} : vector<2x128xf32> to vector<2x32xf32>
    %196 = vector.extract_strided_slice %191 {offsets = [0, 96], sizes = [2, 32], strides = [1, 1]} : vector<2x128xf32> to vector<2x32xf32>
    %197 = arith.mulf %194, %181 : vector<2x32xf32>
    %198 = arith.mulf %193, %195 : vector<2x32xf32>
    %199 = arith.addf %197, %198 : vector<2x32xf32>
    %200 = math.tanh %199 : vector<2x32xf32>
    %201 = arith.mulf %196, %200 : vector<2x32xf32>
    %c0_59 = arith.constant 0 : index
    %c0_60 = arith.constant 0 : index
    %202 = vector.load %arg4[%c0_59, %c0_60] : memref<32x128xf32, #tpu.memory_space<vmem>>, vector<32x128xf32>
    %cst_61 = arith.constant dense<0.000000e+00> : vector<2x128xf32>
    %203 = tpu.matmul %201, %202, %cst_61 {dimension_numbers = #tpu.dot_dimension_numbers<[1], [0], [0], [1], [0, 0, 1, 1], [], []>} : vector<2x32xf32>, vector<32x128xf32>, vector<2x128xf32> -> vector<2x128xf32>
    %c0_62 = arith.constant 0 : index
    %c0_63 = arith.constant 0 : index
    %204 = vector.load %arg5[%c0_62, %c0_63] : memref<1x128xf32, #tpu.memory_space<vmem>>, vector<1x128xf32>
    %205 = vector.broadcast %204 : vector<1x128xf32> to vector<2x128xf32>
    %206 = arith.addf %203, %205 : vector<2x128xf32>
    %c0_64 = arith.constant 0 : index
    %c0_65 = arith.constant 0 : index
    %207 = vector.load %arg6[%c0_64, %c0_65] : memref<2x128xf32, #tpu.memory_space<vmem>>, vector<2x128xf32>
    tpu.vector_store %arg6[%c0_64, %c0_65], %206 {strides = array<i32>} : memref<2x128xf32, #tpu.memory_space<vmem>>, vector<2x128xf32>,
    return
  }
  func.func @transform_0(%arg0: i32, %arg1: memref<2x8xi32, #tpu.memory_space<smem>>) -> (i32, i32) {
    %c0_i32 = arith.constant 0 : i32
    %c0_i32_0 = arith.constant 0 : i32
    %c0_i32_1 = arith.constant 0 : i32
    return %c0_i32, %c0_i32_0 : i32, i32
  }
  func.func @transform_1(%arg0: i32, %arg1: memref<2x8xi32, #tpu.memory_space<smem>>) -> (i32, i32) {
    %c0_i32 = arith.constant 0 : i32
    %c0_i32_0 = arith.constant 0 : i32
    %c0_i32_1 = arith.constant 0 : i32
    return %c0_i32, %c0_i32_0 : i32, i32
  }
  func.func @transform_2(%arg0: i32, %arg1: memref<2x8xi32, #tpu.memory_space<smem>>) -> (i32, i32) {
    %c0_i32 = arith.constant 0 : i32
    %c0_i32_0 = arith.constant 0 : i32
    %c0_i32_1 = arith.constant 0 : i32
    return %c0_i32, %c0_i32_0 : i32, i32
  }
  func.func @transform_3(%arg0: i32, %arg1: memref<2x8xi32, #tpu.memory_space<smem>>) -> (i32, i32) {
    %c0_i32 = arith.constant 0 : i32
    %c0_i32_0 = arith.constant 0 : i32
    %c0_i32_1 = arith.constant 0 : i32
    return %c0_i32, %c0_i32_0 : i32, i32
  }
  func.func @transform_4(%arg0: i32, %arg1: memref<2x8xi32, #tpu.memory_space<smem>>) -> (i32, i32) {
    %c0_i32 = arith.constant 0 : i32
    %c0_i32_0 = arith.constant 0 : i32
    %c0_i32_1 = arith.constant 0 : i32
    return %c0_i32, %c0_i32_0 : i32, i32
  }
}

</mosaic_0001>

<llo_original>
// kernel: rnn_forward.1
$region0: #{rnn_forward.1}
  #allocation0 [shape = 'u32[]', space=smem, size = 0x4, offset = 0x4, fixed_abs, tag = 'smem constant byte address 0x4 - core index']
  #allocation1 [shape = 'u32[72,128]{1,0:T(1,128)}', space=vmem, size = 0x9000, scoped, tag = 'internal scratch']
  #allocation2 [shape = 's32[1]{0}', space=sflag, size = 0x4, scoped, tag = 'scoped memory for rnn_forward.1']
  #allocation3 [shape = 'u8[1024]{0}', space=smem, size = 0x400, scoped, tag = 'prefetched SMEM operand 0']
  %s0 = inlined_call_operand.vmem [shape: s32[2,8], index: 0, kind: input, shape index: {}]
  %s1 = inlined_call_operand.vmem [shape: f32[20,128], index: 1, kind: input, shape index: {}]
  %s2 = inlined_call_operand.vmem [shape: bf16[32,128], index: 2, kind: input, shape index: {}]
  %s3 = inlined_call_operand.vmem [shape: f32[32,128], index: 3, kind: input, shape index: {}]
  %s4 = inlined_call_operand.vmem [shape: f32[1,128], index: 4, kind: input, shape index: {}]
  %s5 = inlined_call_operand.hbm [shape: f32[2,128], index: 5, kind: output, shape index: {}]
  %s6 = sld [smem:[#allocation0]]
  $region26: #{rnn_forward.1} parent=0
    _
  %s8 = ssub.s32 1, %s6
  %s9 = scalar_select 0, %s8, %s6
  %s11 = sshll.u32 %s0, 4
  %s12 = int_to_ptr.vmem [resolvable:$true] %s11
  %14 = dma.vmem_to_smem %s12, 32, [#allocation3], [#allocation2]
  %16 = dma.done [#allocation2], 32
  %17 = sfence
  $region1: #{rnn_forward.1} parent=0
    #allocation4 [shape = 'u8[1024]{0}', space=vmem, size = 0x400, scoped, tag = 'output window, operand 0, single buffered']
    #allocation5 [shape = 's32[1]{0}', space=sflag, size = 0x4, scoped, tag = 'scoped memory for rnn_forward.1']
    %18 = vsyncpa [#allocation5], 0
    // Predicated region
    $region2: #{rnn_forward.1} parent=1 // pred_check
      _
    $region3: #{rnn_forward.1} parent=1 // pred_check_branch
      %20 = sbr.rel (0) target = $region5
    $region4: #{rnn_forward.1} parent=1 // pred_region
      _
    $region5: #{rnn_forward.1} parent=1 // pred_fallthru
      _
    // Predicated region
    $region6: #{rnn_forward.1} parent=1 // pred_check
      _
    $region7: #{rnn_forward.1} parent=1 // pred_check_branch
      %22 = sbr.rel (0) target = $region9
    $region8: #{rnn_forward.1} parent=1 // pred_region
      _
    $region9: #{rnn_forward.1} parent=1 // pred_fallthru
      _
    // Predicated region
    $region10: #{rnn_forward.1} parent=1 // pred_check
      _
    $region11: #{rnn_forward.1} parent=1 // pred_check_branch
      %24 = sbr.rel (0) target = $region13
    $region12: #{rnn_forward.1} parent=1 // pred_region
      _
    $region13: #{rnn_forward.1} parent=1 // pred_fallthru
      _
    // Predicated region
    $region14: #{rnn_forward.1} parent=1 // pred_check
      _
    $region15: #{rnn_forward.1} parent=1 // pred_check_branch
      %26 = sbr.rel (0) target = $region17
    $region16: #{rnn_forward.1} parent=1 // pred_region
      _
    $region17: #{rnn_forward.1} parent=1 // pred_fallthru
      _
    %v28 = vld [vmem:[%s2] sm:$0xf]
    %v29 = vld [vmem:[%s2 + $0x4] sm:$0xf]
    %v30 = vld [vmem:[%s2 + $0x8] sm:$0xf]
    %v31 = vld [vmem:[%s2 + $0xc] sm:$0xf]
    %s32 = sld [smem:[#allocation3]]
    %s33 = scalar_lea.vmem %s1, %s32
    %v34 = vld [vmem:[%s33] sm:$0x1]
    %s35 = sld [smem:[#allocation3 + $0x80]]
    %s36 = scalar_lea.vmem %s1, %s35
    %v37 = vld [vmem:[%s36] sm:$0x1]
    %v39 = vrot.slane %v37, 7
    %vm41 = vcmask 1040384
    %v42 = vsel %vm41, %v34, %v39
    %s43 = sld [smem:[#allocation3 + $0x1]]
    %s44 = scalar_lea.vmem %s1, %s43
    %v45 = vld [vmem:[%s44] sm:$0x1]
    %s46 = sld [smem:[#allocation3 + $0x81]]
    %s47 = scalar_lea.vmem %s1, %s46
    %v48 = vld [vmem:[%s47] sm:$0x1]
    %v50 = vrot.slane %v48, 7
    %v52 = vsel %vm41, %v45, %v50
    %s53 = sld [smem:[#allocation3 + $0x2]]
    %s54 = scalar_lea.vmem %s1, %s53
    %v55 = vld [vmem:[%s54] sm:$0x1]
    %s56 = sld [smem:[#allocation3 + $0x82]]
    %s57 = scalar_lea.vmem %s1, %s56
    %v58 = vld [vmem:[%s57] sm:$0x1]
    %v60 = vrot.slane %v58, 7
    %v62 = vsel %vm41, %v55, %v60
    %s63 = sld [smem:[#allocation3 + $0x3]]
    %s64 = scalar_lea.vmem %s1, %s63
    %v65 = vld [vmem:[%s64] sm:$0x1]
    %s66 = sld [smem:[#allocation3 + $0x83]]
    %s67 = scalar_lea.vmem %s1, %s66
    %v68 = vld [vmem:[%s67] sm:$0x1]
    %v70 = vrot.slane %v68, 7
    %v72 = vsel %vm41, %v65, %v70
    %s73 = sld [smem:[#allocation3 + $0x4]]
    %s74 = scalar_lea.vmem %s1, %s73
    %v75 = vld [vmem:[%s74] sm:$0x1]
    %s76 = sld [smem:[#allocation3 + $0x84]]
    %s77 = scalar_lea.vmem %s1, %s76
    %v78 = vld [vmem:[%s77] sm:$0x1]
    %v80 = vrot.slane %v78, 7
    %v82 = vsel %vm41, %v75, %v80
    %s83 = sld [smem:[#allocation3 + $0x5]]
    %s84 = scalar_lea.vmem %s1, %s83
    %v85 = vld [vmem:[%s84] sm:$0x1]
    %s86 = sld [smem:[#allocation3 + $0x85]]
    %s87 = scalar_lea.vmem %s1, %s86
    %v88 = vld [vmem:[%s87] sm:$0x1]
    %v90 = vrot.slane %v88, 7
    %v92 = vsel %vm41, %v85, %v90
    %s93 = sld [smem:[#allocation3 + $0x6]]
    %s94 = scalar_lea.vmem %s1, %s93
    %v95 = vld [vmem:[%s94] sm:$0x1]
    %s96 = sld [smem:[#allocation3 + $0x86]]
    %s97 = scalar_lea.vmem %s1, %s96
    %v98 = vld [vmem:[%s97] sm:$0x1]
    %v100 = vrot.slane %v98, 7
    %v102 = vsel %vm41, %v95, %v100
    %s103 = sld [smem:[#allocation3 + $0x7]]
    %s104 = scalar_lea.vmem %s1, %s103
    %v105 = vld [vmem:[%s104] sm:$0x1]
    %s106 = sld [smem:[#allocation3 + $0x87]]
    %s107 = scalar_lea.vmem %s1, %s106
    %v108 = vld [vmem:[%s107] sm:$0x1]
    %v110 = vrot.slane %v108, 7
    %v112 = vsel %vm41, %v105, %v110
    %v117 = vunpack.c.l.b16 %v28
    %v118 = vunpack.c.l.b16 %v29
    %v119 = vunpack.c.l.b16 %v30
    %v120 = vunpack.c.l.b16 %v31
    %v121 = vpack.c.b16 %v118, %v117
    %v122 = vpack.c.b16 %v120, %v119
    %vm125 = vcmask 261120
    %v127 = vsel %vm125, 0, 0
    %129 = vmatpush.bf16.msra.mxu0 0
    %130 = vmatpush.bf16.msra.mxu0 0
    %131 = vmatpush.bf16.msra.mxu0 0
    %132 = vmatpush.bf16.msra.mxu0 0
    %133 = vmatpush.bf16.msra.mxu0 0
    %134 = vmatpush.bf16.msra.mxu0 0
    %135 = vmatpush.bf16.msra.mxu0 %v122
    %136 = vmatpush.bf16.msra.mxu0 %v121
    %137 = vmatmul.bf16.gmra.mxu0 %v127
    %v138 = vpop.f32.mrf.mxu0
    %v139 = vadd.f32 0.0, %v138
    %v140 = vpop.f32.mrf.mxu0
    %141 = vdwg.mxu0
    %v142 = vadd.f32 %v42, %v139
    %v143 = vxor.u32 %v142, 2147483648
    %v144 = vmul.f32 %v143, 1.442695
    %v145 = vpow.pop %v144
    %v146 = vadd.f32 %v145, 1.0
    %v147 = vrcp.pop %v146
    %v148 = vmul.f32 %v146, %v147
    %v149 = vsub.f32 1.0, %v148
    %v150 = vmul.f32 %v147, %v149
    %v151 = vadd.f32 %v147, %v150
    %vm152 = vweird.f32 %v146
    %vm153 = vweird.f32 %v147
    %vm154 = vmor %vm152, %vm153
    %v155 = vsel %vm154, %v147, %v151
    %v156 = vand.u32 2147483647, %v146
    %vm157 = vcmp.eq.f32.partialorder %v156, 8.507059e+37
    %v158 = vand.u32 %v146, 2147483648
    %v159 = vor.u32 1.1754944e-38, %v158
    %v160 = vsel %vm157, %v159, %v155
    %v161 = vmul.f32 1.0, %v160
    %v162 = vtanh.pop %v142
    %v163 = vmul.f32 %v161, 0.0
    %165 = vrot.lane.b32.xlu0 %v162, 64
    %v166 = vpop.permute.xlu0 %165
    %v168 = vmul.f32 %v161, %v166
    %170 = vrot.lane.b32.xlu0 %v168, 32
    %v171 = vpop.permute.xlu0 %170
    %v173 = vadd.f32 %v163, %v171
    %v174 = vtanh.pop %v173
    %176 = vrot.lane.b32.xlu0 %v174, 64
    %v177 = vpop.permute.xlu0 %176
    %v179 = vmul.f32 %v161, %v177
    %v180 = vpack.c.bf16 %v179, %v179
    %182 = vrot.lane.b32.xlu0 %v180, 32
    %v183 = vpop.permute.xlu0 %182
    %v185 = vsel %vm125, %v183, 0
    %187 = vmatpush.bf16.msra.mxu0 0
    %188 = vmatpush.bf16.msra.mxu0 0
    %189 = vmatpush.bf16.msra.mxu0 0
    %190 = vmatpush.bf16.msra.mxu0 0
    %191 = vmatpush.bf16.msra.mxu0 0
    %192 = vmatpush.bf16.msra.mxu0 0
    %193 = vmatpush.bf16.msra.mxu0 %v122
    %194 = vmatpush.bf16.msra.mxu0 %v121
    %195 = vmatmul.bf16.gmra.mxu0 %v185
    %v196 = vpop.f32.mrf.mxu0
    %v197 = vadd.f32 0.0, %v196
    %v198 = vpop.f32.mrf.mxu0
    %199 = vdwg.mxu0
    %v200 = vadd.f32 %v52, %v197
    %v201 = vxor.u32 %v200, 2147483648
    %v202 = vmul.f32 %v201, 1.442695
    %v203 = vpow.pop %v202
    %v204 = vadd.f32 %v203, 1.0
    %v205 = vrcp.pop %v204
    %v206 = vmul.f32 %v204, %v205
    %v207 = vsub.f32 1.0, %v206
    %v208 = vmul.f32 %v205, %v207
    %v209 = vadd.f32 %v205, %v208
    %vm210 = vweird.f32 %v204
    %vm211 = vweird.f32 %v205
    %vm212 = vmor %vm210, %vm211
    %v213 = vsel %vm212, %v205, %v209
    %v214 = vand.u32 2147483647, %v204
    %vm215 = vcmp.eq.f32.partialorder %v214, 8.507059e+37
    %v216 = vand.u32 %v204, 2147483648
    %v217 = vor.u32 1.1754944e-38, %v216
    %v218 = vsel %vm215, %v217, %v213
    %v219 = vmul.f32 1.0, %v218
    %v220 = vtanh.pop %v200
    %v221 = vmul.f32 %v219, %v173
    %223 = vrot.lane.b32.xlu0 %v220, 64
    %v224 = vpop.permute.xlu0 %223
    %v226 = vmul.f32 %v219, %v224
    %228 = vrot.lane.b32.xlu0 %v226, 32
    %v229 = vpop.permute.xlu0 %228
    %v231 = vadd.f32 %v221, %v229
    %v232 = vtanh.pop %v231
    %234 = vrot.lane.b32.xlu0 %v232, 64
    %v235 = vpop.permute.xlu0 %234
    %v237 = vmul.f32 %v219, %v235
    %v238 = vpack.c.bf16 %v237, %v237
    %240 = vrot.lane.b32.xlu0 %v238, 32
    %v241 = vpop.permute.xlu0 %240
    %v243 = vsel %vm125, %v241, 0
    %245 = vmatpush.bf16.msra.mxu0 0
    %246 = vmatpush.bf16.msra.mxu0 0
    %247 = vmatpush.bf16.msra.mxu0 0
    %248 = vmatpush.bf16.msra.mxu0 0
    %249 = vmatpush.bf16.msra.mxu0 0
    %250 = vmatpush.bf16.msra.mxu0 0
    %251 = vmatpush.bf16.msra.mxu0 %v122
    %252 = vmatpush.bf16.msra.mxu0 %v121
    %253 = vmatmul.bf16.gmra.mxu0 %v243
    %v254 = vpop.f32.mrf.mxu0
    %v255 = vadd.f32 0.0, %v254
    %v256 = vpop.f32.mrf.mxu0
    %257 = vdwg.mxu0
    %v258 = vadd.f32 %v62, %v255
    %v259 = vxor.u32 %v258, 2147483648
    %v260 = vmul.f32 %v259, 1.442695
    %v261 = vpow.pop %v260
    %v262 = vadd.f32 %v261, 1.0
    %v263 = vrcp.pop %v262
    %v264 = vmul.f32 %v262, %v263
    %v265 = vsub.f32 1.0, %v264
    %v266 = vmul.f32 %v263, %v265
    %v267 = vadd.f32 %v263, %v266
    %vm268 = vweird.f32 %v262
    %vm269 = vweird.f32 %v263
    %vm270 = vmor %vm268, %vm269
    %v271 = vsel %vm270, %v263, %v267
    %v272 = vand.u32 2147483647, %v262
    %vm273 = vcmp.eq.f32.partialorder %v272, 8.507059e+37
    %v274 = vand.u32 %v262, 2147483648
    %v275 = vor.u32 1.1754944e-38, %v274
    %v276 = vsel %vm273, %v275, %v271
    %v277 = vmul.f32 1.0, %v276
    %v278 = vtanh.pop %v258
    %v279 = vmul.f32 %v277, %v231
    %281 = vrot.lane.b32.xlu0 %v278, 64
    %v282 = vpop.permute.xlu0 %281
    %v284 = vmul.f32 %v277, %v282
    %286 = vrot.lane.b32.xlu0 %v284, 32
    %v287 = vpop.permute.xlu0 %286
    %v289 = vadd.f32 %v279, %v287
    %v290 = vtanh.pop %v289
    %292 = vrot.lane.b32.xlu0 %v290, 64
    %v293 = vpop.permute.xlu0 %292
    %v295 = vmul.f32 %v277, %v293
    %v296 = vpack.c.bf16 %v295, %v295
    %298 = vrot.lane.b32.xlu0 %v296, 32
    %v299 = vpop.permute.xlu0 %298
    %v301 = vsel %vm125, %v299, 0
    %303 = vmatpush.bf16.msra.mxu0 0
    %304 = vmatpush.bf16.msra.mxu0 0
    %305 = vmatpush.bf16.msra.mxu0 0
    %306 = vmatpush.bf16.msra.mxu0 0
    %307 = vmatpush.bf16.msra.mxu0 0
    %308 = vmatpush.bf16.msra.mxu0 0
    %309 = vmatpush.bf16.msra.mxu0 %v122
    %310 = vmatpush.bf16.msra.mxu0 %v121
    %311 = vmatmul.bf16.gmra.mxu0 %v301
    %v312 = vpop.f32.mrf.mxu0
    %v313 = vadd.f32 0.0, %v312
    %v314 = vpop.f32.mrf.mxu0
    %315 = vdwg.mxu0
    %v316 = vadd.f32 %v72, %v313
    %v317 = vxor.u32 %v316, 2147483648
    %v318 = vmul.f32 %v317, 1.442695
    %v319 = vpow.pop %v318
    %v320 = vadd.f32 %v319, 1.0
    %v321 = vrcp.pop %v320
    %v322 = vmul.f32 %v320, %v321
    %v323 = vsub.f32 1.0, %v322
    %v324 = vmul.f32 %v321, %v323
    %v325 = vadd.f32 %v321, %v324
    %vm326 = vweird.f32 %v320
    %vm327 = vweird.f32 %v321
    %vm328 = vmor %vm326, %vm327
    %v329 = vsel %vm328, %v321, %v325
    %v330 = vand.u32 2147483647, %v320
    %vm331 = vcmp.eq.f32.partialorder %v330, 8.507059e+37
    %v332 = vand.u32 %v320, 2147483648
    %v333 = vor.u32 1.1754944e-38, %v332
    %v334 = vsel %vm331, %v333, %v329
    %v335 = vmul.f32 1.0, %v334
    %v336 = vtanh.pop %v316
    %v337 = vmul.f32 %v335, %v289
    %339 = vrot.lane.b32.xlu0 %v336, 64
    %v340 = vpop.permute.xlu0 %339
    %v342 = vmul.f32 %v335, %v340
    %344 = vrot.lane.b32.xlu0 %v342, 32
    %v345 = vpop.permute.xlu0 %344
    %v347 = vadd.f32 %v337, %v345
    %v348 = vtanh.pop %v347
    %350 = vrot.lane.b32.xlu0 %v348, 64
    %v351 = vpop.permute.xlu0 %350
    %v353 = vmul.f32 %v335, %v351
    %v354 = vpack.c.bf16 %v353, %v353
    %356 = vrot.lane.b32.xlu0 %v354, 32
    %v357 = vpop.permute.xlu0 %356
    %v359 = vsel %vm125, %v357, 0
    %361 = vmatpush.bf16.msra.mxu0 0
    %362 = vmatpush.bf16.msra.mxu0 0
    %363 = vmatpush.bf16.msra.mxu0 0
    %364 = vmatpush.bf16.msra.mxu0 0
    %365 = vmatpush.bf16.msra.mxu0 0
    %366 = vmatpush.bf16.msra.mxu0 0
    %367 = vmatpush.bf16.msra.mxu0 %v122
    %368 = vmatpush.bf16.msra.mxu0 %v121
    %369 = vmatmul.bf16.gmra.mxu0 %v359
    %v370 = vpop.f32.mrf.mxu0
    %v371 = vadd.f32 0.0, %v370
    %v372 = vpop.f32.mrf.mxu0
    %373 = vdwg.mxu0
    %v374 = vadd.f32 %v82, %v371
    %v375 = vxor.u32 %v374, 2147483648
    %v376 = vmul.f32 %v375, 1.442695
    %v377 = vpow.pop %v376
    %v378 = vadd.f32 %v377, 1.0
    %v379 = vrcp.pop %v378
    %v380 = vmul.f32 %v378, %v379
    %v381 = vsub.f32 1.0, %v380
    %v382 = vmul.f32 %v379, %v381
    %v383 = vadd.f32 %v379, %v382
    %vm384 = vweird.f32 %v378
    %vm385 = vweird.f32 %v379
    %vm386 = vmor %vm384, %vm385
    %v387 = vsel %vm386, %v379, %v383
    %v388 = vand.u32 2147483647, %v378
    %vm389 = vcmp.eq.f32.partialorder %v388, 8.507059e+37
    %v390 = vand.u32 %v378, 2147483648
    %v391 = vor.u32 1.1754944e-38, %v390
    %v392 = vsel %vm389, %v391, %v387
    %v393 = vmul.f32 1.0, %v392
    %v394 = vtanh.pop %v374
    %v395 = vmul.f32 %v393, %v347
    %397 = vrot.lane.b32.xlu0 %v394, 64
    %v398 = vpop.permute.xlu0 %397
    %v400 = vmul.f32 %v393, %v398
    %402 = vrot.lane.b32.xlu0 %v400, 32
    %v403 = vpop.permute.xlu0 %402
    %v405 = vadd.f32 %v395, %v403
    %v406 = vtanh.pop %v405
    %408 = vrot.lane.b32.xlu0 %v406, 64
    %v409 = vpop.permute.xlu0 %408
    %v411 = vmul.f32 %v393, %v409
    %v412 = vpack.c.bf16 %v411, %v411
    %414 = vrot.lane.b32.xlu0 %v412, 32
    %v415 = vpop.permute.xlu0 %414
    %v417 = vsel %vm125, %v415, 0
    %419 = vmatpush.bf16.msra.mxu0 0
    %420 = vmatpush.bf16.msra.mxu0 0
    %421 = vmatpush.bf16.msra.mxu0 0
    %422 = vmatpush.bf16.msra.mxu0 0
    %423 = vmatpush.bf16.msra.mxu0 0
    %424 = vmatpush.bf16.msra.mxu0 0
    %425 = vmatpush.bf16.msra.mxu0 %v122
    %426 = vmatpush.bf16.msra.mxu0 %v121
    %427 = vmatmul.bf16.gmra.mxu0 %v417
    %v428 = vpop.f32.mrf.mxu0
    %v429 = vadd.f32 0.0, %v428
    %v430 = vpop.f32.mrf.mxu0
    %431 = vdwg.mxu0
    %v432 = vadd.f32 %v92, %v429
    %v433 = vxor.u32 %v432, 2147483648
    %v434 = vmul.f32 %v433, 1.442695
    %v435 = vpow.pop %v434
    %v436 = vadd.f32 %v435, 1.0
    %v437 = vrcp.pop %v436
    %v438 = vmul.f32 %v436, %v437
    %v439 = vsub.f32 1.0, %v438
    %v440 = vmul.f32 %v437, %v439
    %v441 = vadd.f32 %v437, %v440
    %vm442 = vweird.f32 %v436
    %vm443 = vweird.f32 %v437
    %vm444 = vmor %vm442, %vm443
    %v445 = vsel %vm444, %v437, %v441
    %v446 = vand.u32 2147483647, %v436
    %vm447 = vcmp.eq.f32.partialorder %v446, 8.507059e+37
    %v448 = vand.u32 %v436, 2147483648
    %v449 = vor.u32 1.1754944e-38, %v448
    %v450 = vsel %vm447, %v449, %v445
    %v451 = vmul.f32 1.0, %v450
    %v452 = vtanh.pop %v432
    %v453 = vmul.f32 %v451, %v405
    %455 = vrot.lane.b32.xlu0 %v452, 64
    %v456 = vpop.permute.xlu0 %455
    %v458 = vmul.f32 %v451, %v456
    %460 = vrot.lane.b32.xlu0 %v458, 32
    %v461 = vpop.permute.xlu0 %460
    %v463 = vadd.f32 %v453, %v461
    %v464 = vtanh.pop %v463
    %466 = vrot.lane.b32.xlu0 %v464, 64
    %v467 = vpop.permute.xlu0 %466
    %v469 = vmul.f32 %v451, %v467
    %v470 = vpack.c.bf16 %v469, %v469
    %472 = vrot.lane.b32.xlu0 %v470, 32
    %v473 = vpop.permute.xlu0 %472
    %v475 = vsel %vm125, %v473, 0
    %477 = vmatpush.bf16.msra.mxu0 0
    %478 = vmatpush.bf16.msra.mxu0 0
    %479 = vmatpush.bf16.msra.mxu0 0
    %480 = vmatpush.bf16.msra.mxu0 0
    %481 = vmatpush.bf16.msra.mxu0 0
    %482 = vmatpush.bf16.msra.mxu0 0
    %483 = vmatpush.bf16.msra.mxu0 %v122
    %484 = vmatpush.bf16.msra.mxu0 %v121
    %485 = vmatmul.bf16.gmra.mxu0 %v475
    %v486 = vpop.f32.mrf.mxu0
    %v487 = vadd.f32 0.0, %v486
    %v488 = vpop.f32.mrf.mxu0
    %489 = vdwg.mxu0
    %v490 = vadd.f32 %v102, %v487
    %v491 = vxor.u32 %v490, 2147483648
    %v492 = vmul.f32 %v491, 1.442695
    %v493 = vpow.pop %v492
    %v494 = vadd.f32 %v493, 1.0
    %v495 = vrcp.pop %v494
    %v496 = vmul.f32 %v494, %v495
    %v497 = vsub.f32 1.0, %v496
    %v498 = vmul.f32 %v495, %v497
    %v499 = vadd.f32 %v495, %v498
    %vm500 = vweird.f32 %v494
    %vm501 = vweird.f32 %v495
    %vm502 = vmor %vm500, %vm501
    %v503 = vsel %vm502, %v495, %v499
    %v504 = vand.u32 2147483647, %v494
    %vm505 = vcmp.eq.f32.partialorder %v504, 8.507059e+37
    %v506 = vand.u32 %v494, 2147483648
    %v507 = vor.u32 1.1754944e-38, %v506
    %v508 = vsel %vm505, %v507, %v503
    %v509 = vmul.f32 1.0, %v508
    %v510 = vtanh.pop %v490
    %v511 = vmul.f32 %v509, %v463
    %513 = vrot.lane.b32.xlu0 %v510, 64
    %v514 = vpop.permute.xlu0 %513
    %v516 = vmul.f32 %v509, %v514
    %518 = vrot.lane.b32.xlu0 %v516, 32
    %v519 = vpop.permute.xlu0 %518
    %v521 = vadd.f32 %v511, %v519
    %v522 = vtanh.pop %v521
    %524 = vrot.lane.b32.xlu0 %v522, 64
    %v525 = vpop.permute.xlu0 %524
    %v527 = vmul.f32 %v509, %v525
    %v528 = vpack.c.bf16 %v527, %v527
    %530 = vrot.lane.b32.xlu0 %v528, 32
    %v531 = vpop.permute.xlu0 %530
    %v533 = vsel %vm125, %v531, 0
    %535 = vmatpush.bf16.msra.mxu0 0
    %536 = vmatpush.bf16.msra.mxu0 0
    %537 = vmatpush.bf16.msra.mxu0 0
    %538 = vmatpush.bf16.msra.mxu0 0
    %539 = vmatpush.bf16.msra.mxu0 0
    %540 = vmatpush.bf16.msra.mxu0 0
    %541 = vmatpush.bf16.msra.mxu0 %v122
    %542 = vmatpush.bf16.msra.mxu0 %v121
    %543 = vmatmul.bf16.gmra.mxu0 %v533
    %v544 = vpop.f32.mrf.mxu0
    %v545 = vadd.f32 0.0, %v544
    %v546 = vpop.f32.mrf.mxu0
    %547 = vdwg.mxu0
    %v548 = vadd.f32 %v112, %v545
    %v549 = vxor.u32 %v548, 2147483648
    %v550 = vmul.f32 %v549, 1.442695
    %v551 = vpow.pop %v550
    %v552 = vadd.f32 %v551, 1.0
    %v553 = vrcp.pop %v552
    %v554 = vmul.f32 %v552, %v553
    %v555 = vsub.f32 1.0, %v554
    %v556 = vmul.f32 %v553, %v555
    %v557 = vadd.f32 %v553, %v556
    %vm558 = vweird.f32 %v552
    %vm559 = vweird.f32 %v553
    %vm560 = vmor %vm558, %vm559
    %v561 = vsel %vm560, %v553, %v557
    %v562 = vand.u32 2147483647, %v552
    %vm563 = vcmp.eq.f32.partialorder %v562, 8.507059e+37
    %v564 = vand.u32 %v552, 2147483648
    %v565 = vor.u32 1.1754944e-38, %v564
    %v566 = vsel %vm563, %v565, %v561
    %v567 = vmul.f32 1.0, %v566
    %v568 = vtanh.pop %v548
    %v569 = vmul.f32 %v567, %v521
    %571 = vrot.lane.b32.xlu0 %v568, 64
    %v572 = vpop.permute.xlu0 %571
    %v574 = vmul.f32 %v567, %v572
    %576 = vrot.lane.b32.xlu0 %v574, 32
    %v577 = vpop.permute.xlu0 %576
    %v579 = vadd.f32 %v569, %v577
    %v580 = vtanh.pop %v579
    %582 = vrot.lane.b32.xlu0 %v580, 64
    %v583 = vpop.permute.xlu0 %582
    %v585 = vmul.f32 %v567, %v583
    %v586 = vld [vmem:[%s3] sm:$0xff]
    %v587 = vld [vmem:[%s3 + $0x8] sm:$0xff]
    %v588 = vld [vmem:[%s3 + $0x10] sm:$0xff]
    %v589 = vld [vmem:[%s3 + $0x18] sm:$0xff]
    %v590 = vld [vmem:[%s4] sm:$0x1]
    %v592 = vperm.slane %v590, 0
    %595 = vrot.lane.b32.xlu0 %v585, 32
    %v596 = vpop.permute.xlu0 %595
    %v597 = vsel %vm125, %v596, 0
    %599 = vmatpush.msra.mxu0 0.0
    %600 = vmatpush.msra.mxu0 0.0
    %601 = vmatpush.msra.mxu0 0.0
    %602 = vmatpush.msra.mxu0 0.0
    %603 = vmatpush.msra.mxu0 0.0
    %604 = vmatpush.msra.mxu0 0.0
    %605 = vmatpush.msra.mxu0 0.0
    %606 = vmatpush.msra.mxu0 0.0
    %607 = vmatpush.msra.mxu0 0.0
    %608 = vmatpush.msra.mxu0 0.0
    %609 = vmatpush.msra.mxu0 0.0
    %610 = vmatpush.msra.mxu0 0.0
    %611 = vmatpush.msra.mxu0 %v589
    %612 = vmatpush.msra.mxu0 %v588
    %613 = vmatpush.msra.mxu0 %v587
    %614 = vmatpush.msra.mxu0 %v586
    %615 = vmatmul.f32.gmra.mxu0 %v597
    %v616 = vpop.f32.mrf.mxu0
    %v617 = vadd.f32 %v592, %v616
    %618 = vdwg.mxu0
    %619 = vst [vmem:[#allocation4] sm:$0x3] %v617
    // Predicated region
    $region18: #{rnn_forward.1} parent=1 // pred_check
      _
    $region19: #{rnn_forward.1} parent=1 // pred_check_branch
      %621 = sbr.rel (0) target = $region21
    $region20: #{rnn_forward.1} parent=1 // pred_region
      %623 = vsyncadd [#allocation5], 0
      %s625 = sshll.u32 [#allocation4], 4
      %s626 = int_to_ptr.vmem [resolvable:$true] %s625
      %s627 = sshll.u32 %s5, 4
      %s628 = int_to_ptr.hbm [resolvable:$true] %s627
      %630 = dma.vmem_to_hbm [thread:$0]  %s626, 32, %s628, [#allocation5]
    $region21: #{rnn_forward.1} parent=1 // pred_fallthru
      _
    // Predicated region
    $region22: #{rnn_forward.1} parent=1 // pred_check
      _
    $region23: #{rnn_forward.1} parent=1 // pred_check_branch
      %632 = sbr.rel (0) target = $region25
    $region24: #{rnn_forward.1} parent=1 // pred_region
      %634 = dma.done [#allocation5], 32
    $region25: #{rnn_forward.1} parent=1 // pred_fallthru
      _
    %635 = vsyncpa [#allocation5], 1

</llo_original>
